<compile_context>
chip_gen: v5e
topology: v5e:2x2
jax: 0.10.0
libtpu: 0.0.40
codegen_flags: <defaults>
</compile_context>

<pallas_src>
import functools
import math

import jax
import jax.numpy as jnp
from jax.experimental import pallas as pl
from jax.experimental.pallas import tpu as pltpu


def _bert_embedding_kernel(ids_ref, seed_ref,                    # scalar prefetch (SMEM)
                           seg_ref, tok_hbm, seg_tab_ref, pe_ref,  # inputs
                           out_ref,                              # output tile (tile, E)
                           rows_ref, dma_sem,                    # scratch
                           *, dropout_p, train, tile, embed):
    i = pl.program_id(0)
    base = i * tile

    # ---- TokenEmbedding: DMA row gather HBM -> VMEM (tile outstanding copies) ----
    copies = []
    for t in range(tile):
        tok_id = ids_ref[base + t]
        cp = pltpu.make_async_copy(tok_hbm.at[pl.ds(tok_id, 1)],
                                   rows_ref.at[pl.ds(t, 1)],
                                   dma_sem.at[t])
        cp.start()
        copies.append(cp)

    # ---- SegmentEmbedding on the VPU (only 3 valid rows) while the DMAs fly ----
    segs = seg_ref[...]                                  # (tile, 1) int32
    tab = seg_tab_ref[...]                               # (8, E)  float32
    seg_emb = (jnp.where(segs == 0, tab[0:1, :], 0.0)
               + jnp.where(segs == 1, tab[1:2, :], 0.0)
               + jnp.where(segs == 2, tab[2:3, :], 0.0))  # (tile, E)

    # ---- PositionalEmbedding: precomputed sin/cos rows for this row tile ----
    x = seg_emb + pe_ref[...]

    # ---- Dropout mask bits (integer threshold compare), still overlapping DMAs ----
    keep = None
    if train and dropout_p > 0.0:
        seed = seed_ref[0].astype(jnp.uint32)
        row_g = base + jax.lax.broadcasted_iota(jnp.int32, (tile, embed), 0)
        col = jax.lax.broadcasted_iota(jnp.int32, (tile, embed), 1)
        h = (row_g * embed + col).astype(jnp.uint32)      # absolute element index
        h = h * jnp.uint32(0x9E3779B9) + seed
        h = h ^ (h >> 16)
        h = h * jnp.uint32(0x7FEB352D)
        h = h ^ (h >> 15)
        h = h * jnp.uint32(0x846CA68B)
        h = h ^ (h >> 16)
        r24 = (h >> 8).astype(jnp.int32)                  # uniform in [0, 2^24)
        keep = r24 >= jnp.int32(int(round(dropout_p * float(1 << 24))))

    # ---- wait for the gathered token rows and finish ----
    for cp in copies:
        cp.wait()
    x = x + rows_ref[...]

    if keep is not None:
        x = jnp.where(keep, x * (1.0 / (1.0 - dropout_p)), 0.0)

    out_ref[...] = x.astype(out_ref.dtype)


def bert_embedding_forward(sequence, segment_label, tok_table, seg_table, pe,
                           seed, *, dropout_p=0.5, train=True, row_tile=None):
    """Pallas forward of BERTEmbedding. sequence/segment_label: (B, S) int32."""
    B, S = sequence.shape
    V, E = tok_table.shape
    N = B * S
    tile = row_tile if row_tile is not None else min(256, S)
    assert S % tile == 0 and N % tile == 0, "row tile must divide the sequence length"
    assert E % 128 == 0, "embed size must be a multiple of 128 (lane axis)"

    ids_flat = sequence.reshape(N).astype(jnp.int32)
    segs2d = segment_label.reshape(N, 1).astype(jnp.int32)
    seed_arr = jnp.asarray(seed, dtype=jnp.int32).reshape(1)

    num_tiles = N // tile
    pe_blocks = S // tile
    nseg = seg_table.shape[0]

    kernel = functools.partial(_bert_embedding_kernel, dropout_p=float(dropout_p),
                               train=bool(train), tile=tile, embed=E)

    grid_spec = pltpu.PrefetchScalarGridSpec(
        num_scalar_prefetch=2,                 # (ids, seed) land in SMEM
        grid=(num_tiles,),
        in_specs=[
            pl.BlockSpec((tile, 1), lambda i, ids, sd: (i, 0)),            # segment ids
            pl.BlockSpec(memory_space=pl.ANY),                             # token table (HBM)
            pl.BlockSpec((nseg, E), lambda i, ids, sd: (0, 0)),            # segment table
            pl.BlockSpec((tile, E), lambda i, ids, sd: (i % pe_blocks, 0)),  # positional table
        ],
        out_specs=pl.BlockSpec((tile, E), lambda i, ids, sd: (i, 0)),
        scratch_shapes=[
            pltpu.VMEM((tile, E), jnp.float32),   # gathered token rows
            pltpu.SemaphoreType.DMA((tile,)),     # one DMA sem per outstanding row copy
        ],
    )

    # Explicit VMEM budget: double-buffered tiles + gather scratch + headroom.
    vmem_bytes = (2 * (tile * E * 4 + tile * 4 + tile * E * 4 + nseg * E * 4)
                  + tile * E * 4)
    vmem_limit = int(min(vmem_bytes + (4 << 20), 32 << 20))

    out = pl.pallas_call(
        kernel,
        out_shape=jax.ShapeDtypeStruct((N, E), jnp.float32),
        grid_spec=grid_spec,
        compiler_params=pltpu.CompilerParams(
            dimension_semantics=("parallel",),
            vmem_limit_bytes=vmem_limit),
    )(ids_flat, seed_arr, segs2d, tok_table, seg_table, pe)
    return out.reshape(B, S, E)


def sinusoidal_pe(seq_len, d_model):
    """Standard PositionalEmbedding table (sin on even dims, cos on odd dims)."""
    position = jnp.arange(seq_len, dtype=jnp.float32)[:, None]
    div_term = jnp.exp(jnp.arange(0, d_model, 2, dtype=jnp.float32)
                       * -(math.log(10000.0) / d_model))
    pe = jnp.zeros((seq_len, d_model), dtype=jnp.float32)
    pe = pe.at[:, 0::2].set(jnp.sin(position * div_term))
    pe = pe.at[:, 1::2].set(jnp.cos(position * div_term))
    return pe


if __name__ == "__main__":
    B, S, V, E = 2, 8, 64, 128
    NSEG_PAD = 8   # SegmentEmbedding is nn.Embedding(3, E); pad rows to 8 for TPU tiling.

    key = jax.random.PRNGKey(0)
    k_tok, k_seg, k_ids = jax.random.split(key, 3)

    # TokenEmbedding weights: nn.Embedding(V, E, padding_idx=0) -> row 0 is zero.
    tok_table = (jax.random.normal(k_tok, (V, E), jnp.float32) * 0.02).at[0].set(0.0)

    # SegmentEmbedding weights: nn.Embedding(3, E, padding_idx=0), zero-padded to 8 rows.
    seg_rows = (jax.random.normal(k_seg, (3, E), jnp.float32) * 0.02).at[0].set(0.0)
    seg_table = jnp.zeros((NSEG_PAD, E), jnp.float32).at[:3].set(seg_rows)

    pe = sinusoidal_pe(S, E)

    sequence = jax.random.randint(k_ids, (B, S), 0, V, dtype=jnp.int32)
    segment_label = jnp.array([[1, 1, 1, 1, 2, 2, 2, 2],
                               [1, 1, 1, 1, 1, 2, 2, 0]], dtype=jnp.int32)
    seed = jnp.array([0], dtype=jnp.int32)

    # Eval-mode run: compare against a pure-JAX reference (no dropout).
    out_eval = bert_embedding_forward(sequence, segment_label, tok_table,
                                      seg_table, pe, seed,
                                      dropout_p=0.5, train=False)
    jax.block_until_ready(out_eval)
    ref = tok_table[sequence] + pe[None, :, :] + seg_table[segment_label]
    assert out_eval.shape == (B, S, E) and out_eval.dtype == jnp.float32
    assert jnp.allclose(out_eval, ref, atol=1e-5, rtol=1e-5), "mismatch vs reference"

    # Training-mode run (inverted dropout, p = 0.5).
    out_train = bert_embedding_forward(sequence, segment_label, tok_table,
                                       seg_table, pe, seed,
                                       dropout_p=0.5, train=True)
    jax.block_until_ready(out_train)
    assert out_train.shape == (B, S, E) and out_train.dtype == jnp.float32
    assert bool(jnp.all(jnp.isfinite(out_train)))
    print("KERNEL_OK")
</pallas_src>

<mosaic_0001>
module attributes {stable_mosaic.version = 11 : i64} {
  func.func @_bert_embedding_kernel(%arg0: i32, %arg1: memref<16xi32, #tpu.memory_space<smem>>, %arg2: memref<1xi32, #tpu.memory_space<smem>>, %arg3: memref<8x1xi32, #tpu.memory_space<vmem>>, %arg4: memref<64x128xf32, #tpu.memory_space<any>>, %arg5: memref<8x128xf32, #tpu.memory_space<vmem>>, %arg6: memref<8x128xf32, #tpu.memory_space<vmem>>, %arg7: memref<8x128xf32, #tpu.memory_space<vmem>>, %arg8: memref<8x128xf32, #tpu.memory_space<vmem>>, %arg9: memref<8x!tpu.dma_semaphore, #tpu.memory_space<semaphore_mem>>) attributes {dimension_semantics = [#tpu.dimension_semantics<parallel>], iteration_bounds = array<i64: 2>, scalar_prefetch = 2 : i64, scratch_operands = 2 : i64, tpu.core_type = #tpu.core_type<tc>, window_params = [{transform_indices = @transform_0, window_bounds = array<i64: 8, 1>}, {}, {pipeline_mode = #tpu.pipeline_mode<synchronous>, transform_indices = @transform_2, window_bounds = array<i64: 8, 128>}, {transform_indices = @transform_3, window_bounds = array<i64: 8, 128>}, {transform_indices = @transform_4, window_bounds = array<i64: 8, 128>}]} {
    %c8_i32 = arith.constant 8 : i32
    %0 = arith.muli %arg0, %c8_i32 : i32
    %c0_i32 = arith.constant 0 : i32
    %1 = arith.addi %0, %c0_i32 : i32
    %2 = arith.index_cast %1 : i32 to index
    %3 = memref.load %arg1[%2] : memref<16xi32, #tpu.memory_space<smem>>
    %c0_i32_0 = arith.constant 0 : i32
    %c0_i32_1 = arith.constant 0 : i32
    %4 = tpu.memref_slice %arg4[%3, %c0_i32_1] : memref<64x128xf32, #tpu.memory_space<any>> -> memref<1x128xf32, #tpu.memory_space<any>>
    %c0_i32_2 = arith.constant 0 : i32
    %c0_i32_3 = arith.constant 0 : i32
    %5 = tpu.memref_slice %arg8[%c0_i32_2, %c0_i32_3] : memref<8x128xf32, #tpu.memory_space<vmem>> -> memref<1x128xf32, #tpu.memory_space<vmem>>
    %6 = tpu.memref_slice %arg9[%c0_i32_0] : memref<8x!tpu.dma_semaphore, #tpu.memory_space<semaphore_mem>> -> memref<1x!tpu.dma_semaphore, #tpu.memory_space<semaphore_mem>>
    %7 = tpu.memref_squeeze %6 : memref<1x!tpu.dma_semaphore, #tpu.memory_space<semaphore_mem>> -> memref<!tpu.dma_semaphore, #tpu.memory_space<semaphore_mem>>
    tpu.enqueue_dma source(%4 : memref<1x128xf32, #tpu.memory_space<any>>) target(%5 : memref<1x128xf32, #tpu.memory_space<vmem>>) target_semaphore(%7 : memref<!tpu.dma_semaphore, #tpu.memory_space<semaphore_mem>>)
    %c1_i32 = arith.constant 1 : i32
    %8 = arith.addi %0, %c1_i32 : i32
    %9 = arith.index_cast %8 : i32 to index
    %10 = memref.load %arg1[%9] : memref<16xi32, #tpu.memory_space<smem>>
    %c1_i32_4 = arith.constant 1 : i32
    %c0_i32_5 = arith.constant 0 : i32
    %11 = tpu.memref_slice %arg4[%10, %c0_i32_5] : memref<64x128xf32, #tpu.memory_space<any>> -> memref<1x128xf32, #tpu.memory_space<any>>
    %c1_i32_6 = arith.constant 1 : i32
    %c0_i32_7 = arith.constant 0 : i32
    %12 = tpu.memref_slice %arg8[%c1_i32_6, %c0_i32_7] : memref<8x128xf32, #tpu.memory_space<vmem>> -> memref<1x128xf32, #tpu.memory_space<vmem>>
    %13 = tpu.memref_slice %arg9[%c1_i32_4] : memref<8x!tpu.dma_semaphore, #tpu.memory_space<semaphore_mem>> -> memref<1x!tpu.dma_semaphore, #tpu.memory_space<semaphore_mem>>
    %14 = tpu.memref_squeeze %13 : memref<1x!tpu.dma_semaphore, #tpu.memory_space<semaphore_mem>> -> memref<!tpu.dma_semaphore, #tpu.memory_space<semaphore_mem>>
    tpu.enqueue_dma source(%11 : memref<1x128xf32, #tpu.memory_space<any>>) target(%12 : memref<1x128xf32, #tpu.memory_space<vmem>>) target_semaphore(%14 : memref<!tpu.dma_semaphore, #tpu.memory_space<semaphore_mem>>)
    %c2_i32 = arith.constant 2 : i32
    %15 = arith.addi %0, %c2_i32 : i32
    %16 = arith.index_cast %15 : i32 to index
    %17 = memref.load %arg1[%16] : memref<16xi32, #tpu.memory_space<smem>>
    %c2_i32_8 = arith.constant 2 : i32
    %c0_i32_9 = arith.constant 0 : i32
    %18 = tpu.memref_slice %arg4[%17, %c0_i32_9] : memref<64x128xf32, #tpu.memory_space<any>> -> memref<1x128xf32, #tpu.memory_space<any>>
    %c2_i32_10 = arith.constant 2 : i32
    %c0_i32_11 = arith.constant 0 : i32
    %19 = tpu.memref_slice %arg8[%c2_i32_10, %c0_i32_11] : memref<8x128xf32, #tpu.memory_space<vmem>> -> memref<1x128xf32, #tpu.memory_space<vmem>>
    %20 = tpu.memref_slice %arg9[%c2_i32_8] : memref<8x!tpu.dma_semaphore, #tpu.memory_space<semaphore_mem>> -> memref<1x!tpu.dma_semaphore, #tpu.memory_space<semaphore_mem>>
    %21 = tpu.memref_squeeze %20 : memref<1x!tpu.dma_semaphore, #tpu.memory_space<semaphore_mem>> -> memref<!tpu.dma_semaphore, #tpu.memory_space<semaphore_mem>>
    tpu.enqueue_dma source(%18 : memref<1x128xf32, #tpu.memory_space<any>>) target(%19 : memref<1x128xf32, #tpu.memory_space<vmem>>) target_semaphore(%21 : memref<!tpu.dma_semaphore, #tpu.memory_space<semaphore_mem>>)
    %c3_i32 = arith.constant 3 : i32
    %22 = arith.addi %0, %c3_i32 : i32
    %23 = arith.index_cast %22 : i32 to index
    %24 = memref.load %arg1[%23] : memref<16xi32, #tpu.memory_space<smem>>
    %c3_i32_12 = arith.constant 3 : i32
    %c0_i32_13 = arith.constant 0 : i32
    %25 = tpu.memref_slice %arg4[%24, %c0_i32_13] : memref<64x128xf32, #tpu.memory_space<any>> -> memref<1x128xf32, #tpu.memory_space<any>>
    %c3_i32_14 = arith.constant 3 : i32
    %c0_i32_15 = arith.constant 0 : i32
    %26 = tpu.memref_slice %arg8[%c3_i32_14, %c0_i32_15] : memref<8x128xf32, #tpu.memory_space<vmem>> -> memref<1x128xf32, #tpu.memory_space<vmem>>
    %27 = tpu.memref_slice %arg9[%c3_i32_12] : memref<8x!tpu.dma_semaphore, #tpu.memory_space<semaphore_mem>> -> memref<1x!tpu.dma_semaphore, #tpu.memory_space<semaphore_mem>>
    %28 = tpu.memref_squeeze %27 : memref<1x!tpu.dma_semaphore, #tpu.memory_space<semaphore_mem>> -> memref<!tpu.dma_semaphore, #tpu.memory_space<semaphore_mem>>
    tpu.enqueue_dma source(%25 : memref<1x128xf32, #tpu.memory_space<any>>) target(%26 : memref<1x128xf32, #tpu.memory_space<vmem>>) target_semaphore(%28 : memref<!tpu.dma_semaphore, #tpu.memory_space<semaphore_mem>>)
    %c4_i32 = arith.constant 4 : i32
    %29 = arith.addi %0, %c4_i32 : i32
    %30 = arith.index_cast %29 : i32 to index
    %31 = memref.load %arg1[%30] : memref<16xi32, #tpu.memory_space<smem>>
    %c4_i32_16 = arith.constant 4 : i32
    %c0_i32_17 = arith.constant 0 : i32
    %32 = tpu.memref_slice %arg4[%31, %c0_i32_17] : memref<64x128xf32, #tpu.memory_space<any>> -> memref<1x128xf32, #tpu.memory_space<any>>
    %c4_i32_18 = arith.constant 4 : i32
    %c0_i32_19 = arith.constant 0 : i32
    %33 = tpu.memref_slice %arg8[%c4_i32_18, %c0_i32_19] : memref<8x128xf32, #tpu.memory_space<vmem>> -> memref<1x128xf32, #tpu.memory_space<vmem>>
    %34 = tpu.memref_slice %arg9[%c4_i32_16] : memref<8x!tpu.dma_semaphore, #tpu.memory_space<semaphore_mem>> -> memref<1x!tpu.dma_semaphore, #tpu.memory_space<semaphore_mem>>
    %35 = tpu.memref_squeeze %34 : memref<1x!tpu.dma_semaphore, #tpu.memory_space<semaphore_mem>> -> memref<!tpu.dma_semaphore, #tpu.memory_space<semaphore_mem>>
    tpu.enqueue_dma source(%32 : memref<1x128xf32, #tpu.memory_space<any>>) target(%33 : memref<1x128xf32, #tpu.memory_space<vmem>>) target_semaphore(%35 : memref<!tpu.dma_semaphore, #tpu.memory_space<semaphore_mem>>)
    %c5_i32 = arith.constant 5 : i32
    %36 = arith.addi %0, %c5_i32 : i32
    %37 = arith.index_cast %36 : i32 to index
    %38 = memref.load %arg1[%37] : memref<16xi32, #tpu.memory_space<smem>>
    %c5_i32_20 = arith.constant 5 : i32
    %c0_i32_21 = arith.constant 0 : i32
    %39 = tpu.memref_slice %arg4[%38, %c0_i32_21] : memref<64x128xf32, #tpu.memory_space<any>> -> memref<1x128xf32, #tpu.memory_space<any>>
    %c5_i32_22 = arith.constant 5 : i32
    %c0_i32_23 = arith.constant 0 : i32
    %40 = tpu.memref_slice %arg8[%c5_i32_22, %c0_i32_23] : memref<8x128xf32, #tpu.memory_space<vmem>> -> memref<1x128xf32, #tpu.memory_space<vmem>>
    %41 = tpu.memref_slice %arg9[%c5_i32_20] : memref<8x!tpu.dma_semaphore, #tpu.memory_space<semaphore_mem>> -> memref<1x!tpu.dma_semaphore, #tpu.memory_space<semaphore_mem>>
    %42 = tpu.memref_squeeze %41 : memref<1x!tpu.dma_semaphore, #tpu.memory_space<semaphore_mem>> -> memref<!tpu.dma_semaphore, #tpu.memory_space<semaphore_mem>>
    tpu.enqueue_dma source(%39 : memref<1x128xf32, #tpu.memory_space<any>>) target(%40 : memref<1x128xf32, #tpu.memory_space<vmem>>) target_semaphore(%42 : memref<!tpu.dma_semaphore, #tpu.memory_space<semaphore_mem>>)
    %c6_i32 = arith.constant 6 : i32
    %43 = arith.addi %0, %c6_i32 : i32
    %44 = arith.index_cast %43 : i32 to index
    %45 = memref.load %arg1[%44] : memref<16xi32, #tpu.memory_space<smem>>
    %c6_i32_24 = arith.constant 6 : i32
    %c0_i32_25 = arith.constant 0 : i32
    %46 = tpu.memref_slice %arg4[%45, %c0_i32_25] : memref<64x128xf32, #tpu.memory_space<any>> -> memref<1x128xf32, #tpu.memory_space<any>>
    %c6_i32_26 = arith.constant 6 : i32
    %c0_i32_27 = arith.constant 0 : i32
    %47 = tpu.memref_slice %arg8[%c6_i32_26, %c0_i32_27] : memref<8x128xf32, #tpu.memory_space<vmem>> -> memref<1x128xf32, #tpu.memory_space<vmem>>
    %48 = tpu.memref_slice %arg9[%c6_i32_24] : memref<8x!tpu.dma_semaphore, #tpu.memory_space<semaphore_mem>> -> memref<1x!tpu.dma_semaphore, #tpu.memory_space<semaphore_mem>>
    %49 = tpu.memref_squeeze %48 : memref<1x!tpu.dma_semaphore, #tpu.memory_space<semaphore_mem>> -> memref<!tpu.dma_semaphore, #tpu.memory_space<semaphore_mem>>
    tpu.enqueue_dma source(%46 : memref<1x128xf32, #tpu.memory_space<any>>) target(%47 : memref<1x128xf32, #tpu.memory_space<vmem>>) target_semaphore(%49 : memref<!tpu.dma_semaphore, #tpu.memory_space<semaphore_mem>>)
    %c7_i32 = arith.constant 7 : i32
    %50 = arith.addi %0, %c7_i32 : i32
    %51 = arith.index_cast %50 : i32 to index
    %52 = memref.load %arg1[%51] : memref<16xi32, #tpu.memory_space<smem>>
    %c7_i32_28 = arith.constant 7 : i32
    %c0_i32_29 = arith.constant 0 : i32
    %53 = tpu.memref_slice %arg4[%52, %c0_i32_29] : memref<64x128xf32, #tpu.memory_space<any>> -> memref<1x128xf32, #tpu.memory_space<any>>
    %c7_i32_30 = arith.constant 7 : i32
    %c0_i32_31 = arith.constant 0 : i32
    %54 = tpu.memref_slice %arg8[%c7_i32_30, %c0_i32_31] : memref<8x128xf32, #tpu.memory_space<vmem>> -> memref<1x128xf32, #tpu.memory_space<vmem>>
    %55 = tpu.memref_slice %arg9[%c7_i32_28] : memref<8x!tpu.dma_semaphore, #tpu.memory_space<semaphore_mem>> -> memref<1x!tpu.dma_semaphore, #tpu.memory_space<semaphore_mem>>
    %56 = tpu.memref_squeeze %55 : memref<1x!tpu.dma_semaphore, #tpu.memory_space<semaphore_mem>> -> memref<!tpu.dma_semaphore, #tpu.memory_space<semaphore_mem>>
    tpu.enqueue_dma source(%53 : memref<1x128xf32, #tpu.memory_space<any>>) target(%54 : memref<1x128xf32, #tpu.memory_space<vmem>>) target_semaphore(%56 : memref<!tpu.dma_semaphore, #tpu.memory_space<semaphore_mem>>)
    %c0 = arith.constant 0 : index
    %c0_32 = arith.constant 0 : index
    %57 = vector.load %arg3[%c0, %c0_32] : memref<8x1xi32, #tpu.memory_space<vmem>>, vector<8x1xi32>
    %c0_33 = arith.constant 0 : index
    %c0_34 = arith.constant 0 : index
    %58 = vector.load %arg5[%c0_33, %c0_34] : memref<8x128xf32, #tpu.memory_space<vmem>>, vector<8x128xf32>
    %c0_i32_35 = arith.constant 0 : i32
    %59 = vector.broadcast %c0_i32_35 : i32 to vector<8x1xi32>
    %60 = arith.cmpi eq, %57, %59 : vector<8x1xi32>
    %61 = vector.extract_strided_slice %58 {offsets = [0, 0], sizes = [1, 128], strides = [1, 1]} : vector<8x128xf32> to vector<1x128xf32>
    %cst = arith.constant 0.000000e+00 : f32
    %62 = vector.shape_cast %60 : vector<8x1xi1> to vector<8x1xi1>
    %63 = vector.broadcast %62 : vector<8x1xi1> to vector<8x128xi1>
    %64 = vector.shape_cast %61 : vector<1x128xf32> to vector<1x128xf32>
    %65 = vector.broadcast %64 : vector<1x128xf32> to vector<8x128xf32>
    %66 = vector.broadcast %cst : f32 to vector<8x128xf32>
    %67 = arith.select %63, %65, %66 : vector<8x128xi1>, vector<8x128xf32>
    %c1_i32_36 = arith.constant 1 : i32
    %68 = vector.broadcast %c1_i32_36 : i32 to vector<8x1xi32>
    %69 = arith.cmpi eq, %57, %68 : vector<8x1xi32>
    %70 = vector.extract_strided_slice %58 {offsets = [1, 0], sizes = [1, 128], strides = [1, 1]} : vector<8x128xf32> to vector<1x128xf32>
    %cst_37 = arith.constant 0.000000e+00 : f32
    %71 = vector.shape_cast %69 : vector<8x1xi1> to vector<8x1xi1>
    %72 = vector.broadcast %71 : vector<8x1xi1> to vector<8x128xi1>
    %73 = vector.shape_cast %70 : vector<1x128xf32> to vector<1x128xf32>
    %74 = vector.broadcast %73 : vector<1x128xf32> to vector<8x128xf32>
    %75 = vector.broadcast %cst_37 : f32 to vector<8x128xf32>
    %76 = arith.select %72, %74, %75 : vector<8x128xi1>, vector<8x128xf32>
    %77 = arith.addf %67, %76 : vector<8x128xf32>
    %c2_i32_38 = arith.constant 2 : i32
    %78 = vector.broadcast %c2_i32_38 : i32 to vector<8x1xi32>
    %79 = arith.cmpi eq, %57, %78 : vector<8x1xi32>
    %80 = vector.extract_strided_slice %58 {offsets = [2, 0], sizes = [1, 128], strides = [1, 1]} : vector<8x128xf32> to vector<1x128xf32>
    %cst_39 = arith.constant 0.000000e+00 : f32
    %81 = vector.shape_cast %79 : vector<8x1xi1> to vector<8x1xi1>
    %82 = vector.broadcast %81 : vector<8x1xi1> to vector<8x128xi1>
    %83 = vector.shape_cast %80 : vector<1x128xf32> to vector<1x128xf32>
    %84 = vector.broadcast %83 : vector<1x128xf32> to vector<8x128xf32>
    %85 = vector.broadcast %cst_39 : f32 to vector<8x128xf32>
    %86 = arith.select %82, %84, %85 : vector<8x128xi1>, vector<8x128xf32>
    %87 = arith.addf %77, %86 : vector<8x128xf32>
    %c0_40 = arith.constant 0 : index
    %c0_41 = arith.constant 0 : index
    %88 = vector.load %arg6[%c0_40, %c0_41] : memref<8x128xf32, #tpu.memory_space<vmem>>, vector<8x128xf32>
    %89 = arith.addf %87, %88 : vector<8x128xf32>
    %c0_i32_42 = arith.constant 0 : i32
    %c0_i32_43 = arith.constant 0 : i32
    %90 = tpu.memref_slice %arg4[%3, %c0_i32_43] : memref<64x128xf32, #tpu.memory_space<any>> -> memref<1x128xf32, #tpu.memory_space<any>>
    %c0_i32_44 = arith.constant 0 : i32
    %c0_i32_45 = arith.constant 0 : i32
    %91 = tpu.memref_slice %arg8[%c0_i32_44, %c0_i32_45] : memref<8x128xf32, #tpu.memory_space<vmem>> -> memref<1x128xf32, #tpu.memory_space<vmem>>
    %92 = tpu.memref_slice %arg9[%c0_i32_42] : memref<8x!tpu.dma_semaphore, #tpu.memory_space<semaphore_mem>> -> memref<1x!tpu.dma_semaphore, #tpu.memory_space<semaphore_mem>>
    %93 = tpu.memref_squeeze %92 : memref<1x!tpu.dma_semaphore, #tpu.memory_space<semaphore_mem>> -> memref<!tpu.dma_semaphore, #tpu.memory_space<semaphore_mem>>
    tpu.wait_dma2 semaphore(%93 : memref<!tpu.dma_semaphore, #tpu.memory_space<semaphore_mem>>) src(%90 : memref<1x128xf32, #tpu.memory_space<any>>) dst(%91 : memref<1x128xf32, #tpu.memory_space<vmem>>)
    %c1_i32_46 = arith.constant 1 : i32
    %c0_i32_47 = arith.constant 0 : i32
    %94 = tpu.memref_slice %arg4[%10, %c0_i32_47] : memref<64x128xf32, #tpu.memory_space<any>> -> memref<1x128xf32, #tpu.memory_space<any>>
    %c1_i32_48 = arith.constant 1 : i32
    %c0_i32_49 = arith.constant 0 : i32
    %95 = tpu.memref_slice %arg8[%c1_i32_48, %c0_i32_49] : memref<8x128xf32, #tpu.memory_space<vmem>> -> memref<1x128xf32, #tpu.memory_space<vmem>>
    %96 = tpu.memref_slice %arg9[%c1_i32_46] : memref<8x!tpu.dma_semaphore, #tpu.memory_space<semaphore_mem>> -> memref<1x!tpu.dma_semaphore, #tpu.memory_space<semaphore_mem>>
    %97 = tpu.memref_squeeze %96 : memref<1x!tpu.dma_semaphore, #tpu.memory_space<semaphore_mem>> -> memref<!tpu.dma_semaphore, #tpu.memory_space<semaphore_mem>>
    tpu.wait_dma2 semaphore(%97 : memref<!tpu.dma_semaphore, #tpu.memory_space<semaphore_mem>>) src(%94 : memref<1x128xf32, #tpu.memory_space<any>>) dst(%95 : memref<1x128xf32, #tpu.memory_space<vmem>>)
    %c2_i32_50 = arith.constant 2 : i32
    %c0_i32_51 = arith.constant 0 : i32
    %98 = tpu.memref_slice %arg4[%17, %c0_i32_51] : memref<64x128xf32, #tpu.memory_space<any>> -> memref<1x128xf32, #tpu.memory_space<any>>
    %c2_i32_52 = arith.constant 2 : i32
    %c0_i32_53 = arith.constant 0 : i32
    %99 = tpu.memref_slice %arg8[%c2_i32_52, %c0_i32_53] : memref<8x128xf32, #tpu.memory_space<vmem>> -> memref<1x128xf32, #tpu.memory_space<vmem>>
    %100 = tpu.memref_slice %arg9[%c2_i32_50] : memref<8x!tpu.dma_semaphore, #tpu.memory_space<semaphore_mem>> -> memref<1x!tpu.dma_semaphore, #tpu.memory_space<semaphore_mem>>
    %101 = tpu.memref_squeeze %100 : memref<1x!tpu.dma_semaphore, #tpu.memory_space<semaphore_mem>> -> memref<!tpu.dma_semaphore, #tpu.memory_space<semaphore_mem>>
    tpu.wait_dma2 semaphore(%101 : memref<!tpu.dma_semaphore, #tpu.memory_space<semaphore_mem>>) src(%98 : memref<1x128xf32, #tpu.memory_space<any>>) dst(%99 : memref<1x128xf32, #tpu.memory_space<vmem>>)
    %c3_i32_54 = arith.constant 3 : i32
    %c0_i32_55 = arith.constant 0 : i32
    %102 = tpu.memref_slice %arg4[%24, %c0_i32_55] : memref<64x128xf32, #tpu.memory_space<any>> -> memref<1x128xf32, #tpu.memory_space<any>>
    %c3_i32_56 = arith.constant 3 : i32
    %c0_i32_57 = arith.constant 0 : i32
    %103 = tpu.memref_slice %arg8[%c3_i32_56, %c0_i32_57] : memref<8x128xf32, #tpu.memory_space<vmem>> -> memref<1x128xf32, #tpu.memory_space<vmem>>
    %104 = tpu.memref_slice %arg9[%c3_i32_54] : memref<8x!tpu.dma_semaphore, #tpu.memory_space<semaphore_mem>> -> memref<1x!tpu.dma_semaphore, #tpu.memory_space<semaphore_mem>>
    %105 = tpu.memref_squeeze %104 : memref<1x!tpu.dma_semaphore, #tpu.memory_space<semaphore_mem>> -> memref<!tpu.dma_semaphore, #tpu.memory_space<semaphore_mem>>
    tpu.wait_dma2 semaphore(%105 : memref<!tpu.dma_semaphore, #tpu.memory_space<semaphore_mem>>) src(%102 : memref<1x128xf32, #tpu.memory_space<any>>) dst(%103 : memref<1x128xf32, #tpu.memory_space<vmem>>)
    %c4_i32_58 = arith.constant 4 : i32
    %c0_i32_59 = arith.constant 0 : i32
    %106 = tpu.memref_slice %arg4[%31, %c0_i32_59] : memref<64x128xf32, #tpu.memory_space<any>> -> memref<1x128xf32, #tpu.memory_space<any>>
    %c4_i32_60 = arith.constant 4 : i32
    %c0_i32_61 = arith.constant 0 : i32
    %107 = tpu.memref_slice %arg8[%c4_i32_60, %c0_i32_61] : memref<8x128xf32, #tpu.memory_space<vmem>> -> memref<1x128xf32, #tpu.memory_space<vmem>>
    %108 = tpu.memref_slice %arg9[%c4_i32_58] : memref<8x!tpu.dma_semaphore, #tpu.memory_space<semaphore_mem>> -> memref<1x!tpu.dma_semaphore, #tpu.memory_space<semaphore_mem>>
    %109 = tpu.memref_squeeze %108 : memref<1x!tpu.dma_semaphore, #tpu.memory_space<semaphore_mem>> -> memref<!tpu.dma_semaphore, #tpu.memory_space<semaphore_mem>>
    tpu.wait_dma2 semaphore(%109 : memref<!tpu.dma_semaphore, #tpu.memory_space<semaphore_mem>>) src(%106 : memref<1x128xf32, #tpu.memory_space<any>>) dst(%107 : memref<1x128xf32, #tpu.memory_space<vmem>>)
    %c5_i32_62 = arith.constant 5 : i32
    %c0_i32_63 = arith.constant 0 : i32
    %110 = tpu.memref_slice %arg4[%38, %c0_i32_63] : memref<64x128xf32, #tpu.memory_space<any>> -> memref<1x128xf32, #tpu.memory_space<any>>
    %c5_i32_64 = arith.constant 5 : i32
    %c0_i32_65 = arith.constant 0 : i32
    %111 = tpu.memref_slice %arg8[%c5_i32_64, %c0_i32_65] : memref<8x128xf32, #tpu.memory_space<vmem>> -> memref<1x128xf32, #tpu.memory_space<vmem>>
    %112 = tpu.memref_slice %arg9[%c5_i32_62] : memref<8x!tpu.dma_semaphore, #tpu.memory_space<semaphore_mem>> -> memref<1x!tpu.dma_semaphore, #tpu.memory_space<semaphore_mem>>
    %113 = tpu.memref_squeeze %112 : memref<1x!tpu.dma_semaphore, #tpu.memory_space<semaphore_mem>> -> memref<!tpu.dma_semaphore, #tpu.memory_space<semaphore_mem>>
    tpu.wait_dma2 semaphore(%113 : memref<!tpu.dma_semaphore, #tpu.memory_space<semaphore_mem>>) src(%110 : memref<1x128xf32, #tpu.memory_space<any>>) dst(%111 : memref<1x128xf32, #tpu.memory_space<vmem>>)
    %c6_i32_66 = arith.constant 6 : i32
    %c0_i32_67 = arith.constant 0 : i32
    %114 = tpu.memref_slice %arg4[%45, %c0_i32_67] : memref<64x128xf32, #tpu.memory_space<any>> -> memref<1x128xf32, #tpu.memory_space<any>>
    %c6_i32_68 = arith.constant 6 : i32
    %c0_i32_69 = arith.constant 0 : i32
    %115 = tpu.memref_slice %arg8[%c6_i32_68, %c0_i32_69] : memref<8x128xf32, #tpu.memory_space<vmem>> -> memref<1x128xf32, #tpu.memory_space<vmem>>
    %116 = tpu.memref_slice %arg9[%c6_i32_66] : memref<8x!tpu.dma_semaphore, #tpu.memory_space<semaphore_mem>> -> memref<1x!tpu.dma_semaphore, #tpu.memory_space<semaphore_mem>>
    %117 = tpu.memref_squeeze %116 : memref<1x!tpu.dma_semaphore, #tpu.memory_space<semaphore_mem>> -> memref<!tpu.dma_semaphore, #tpu.memory_space<semaphore_mem>>
    tpu.wait_dma2 semaphore(%117 : memref<!tpu.dma_semaphore, #tpu.memory_space<semaphore_mem>>) src(%114 : memref<1x128xf32, #tpu.memory_space<any>>) dst(%115 : memref<1x128xf32, #tpu.memory_space<vmem>>)
    %c7_i32_70 = arith.constant 7 : i32
    %c0_i32_71 = arith.constant 0 : i32
    %118 = tpu.memref_slice %arg4[%52, %c0_i32_71] : memref<64x128xf32, #tpu.memory_space<any>> -> memref<1x128xf32, #tpu.memory_space<any>>
    %c7_i32_72 = arith.constant 7 : i32
    %c0_i32_73 = arith.constant 0 : i32
    %119 = tpu.memref_slice %arg8[%c7_i32_72, %c0_i32_73] : memref<8x128xf32, #tpu.memory_space<vmem>> -> memref<1x128xf32, #tpu.memory_space<vmem>>
    %120 = tpu.memref_slice %arg9[%c7_i32_70] : memref<8x!tpu.dma_semaphore, #tpu.memory_space<semaphore_mem>> -> memref<1x!tpu.dma_semaphore, #tpu.memory_space<semaphore_mem>>
    %121 = tpu.memref_squeeze %120 : memref<1x!tpu.dma_semaphore, #tpu.memory_space<semaphore_mem>> -> memref<!tpu.dma_semaphore, #tpu.memory_space<semaphore_mem>>
    tpu.wait_dma2 semaphore(%121 : memref<!tpu.dma_semaphore, #tpu.memory_space<semaphore_mem>>) src(%118 : memref<1x128xf32, #tpu.memory_space<any>>) dst(%119 : memref<1x128xf32, #tpu.memory_space<vmem>>)
    %c0_74 = arith.constant 0 : index
    %c0_75 = arith.constant 0 : index
    %122 = vector.load %arg8[%c0_74, %c0_75] : memref<8x128xf32, #tpu.memory_space<vmem>>, vector<8x128xf32>
    %123 = arith.addf %89, %122 : vector<8x128xf32>
    %c0_76 = arith.constant 0 : index
    %c0_77 = arith.constant 0 : index
    %124 = vector.load %arg7[%c0_76, %c0_77] : memref<8x128xf32, #tpu.memory_space<vmem>>, vector<8x128xf32>
    tpu.vector_store %arg7[%c0_76, %c0_77], %123 {strides = array<i32>} : memref<8x128xf32, #tpu.memory_space<vmem>>, vector<8x128xf32>,
    return
  }
  func.func @transform_0(%arg0: i32, %arg1: memref<16xi32, #tpu.memory_space<smem>>, %arg2: memref<1xi32, #tpu.memory_space<smem>>) -> (i32, i32) {
    %c0_i32 = arith.constant 0 : i32
    %c0_i32_0 = arith.constant 0 : i32
    return %arg0, %c0_i32 : i32, i32
  }
  func.func @transform_2(%arg0: i32, %arg1: memref<16xi32, #tpu.memory_space<smem>>, %arg2: memref<1xi32, #tpu.memory_space<smem>>) -> (i32, i32) {
    %c0_i32 = arith.constant 0 : i32
    %c0_i32_0 = arith.constant 0 : i32
    %c0_i32_1 = arith.constant 0 : i32
    return %c0_i32, %c0_i32_0 : i32, i32
  }
  func.func @transform_3(%arg0: i32, %arg1: memref<16xi32, #tpu.memory_space<smem>>, %arg2: memref<1xi32, #tpu.memory_space<smem>>) -> (i32, i32) {
    %c1_i32 = arith.constant 1 : i32
    %c0_i32 = arith.constant 0 : i32
    %0 = arith.cmpi eq, %c1_i32, %c0_i32 : i32
    %c1_i32_0 = arith.constant 1 : i32
    %1 = arith.select %0, %c1_i32_0, %c1_i32 : i32
    %2 = arith.remsi %arg0, %1 : i32
    %c0_i32_1 = arith.constant 0 : i32
    %3 = arith.cmpi ne, %2, %c0_i32_1 : i32
    %c0_i32_2 = arith.constant 0 : i32
    %4 = arith.cmpi slt, %2, %c0_i32_2 : i32
    %c0_i32_3 = arith.constant 0 : i32
    %5 = arith.cmpi slt, %1, %c0_i32_3 : i32
    %6 = arith.xori %4, %5 : i1
    %7 = arith.andi %6, %3 : i1
    %8 = arith.addi %2, %1 : i32
    %9 = arith.select %7, %8, %2 : i32
    %c0_i32_4 = arith.constant 0 : i32
    %c0_i32_5 = arith.constant 0 : i32
    return %9, %c0_i32_4 : i32, i32
  }
  func.func @transform_4(%arg0: i32, %arg1: memref<16xi32, #tpu.memory_space<smem>>, %arg2: memref<1xi32, #tpu.memory_space<smem>>) -> (i32, i32) {
    %c0_i32 = arith.constant 0 : i32
    %c0_i32_0 = arith.constant 0 : i32
    return %arg0, %c0_i32 : i32, i32
  }
}

</mosaic_0001>

<llo_original>
// kernel: tpu_custom_call.1
$region0: #{tpu_custom_call.1}
  #allocation0 [shape = 'u32[]', space=smem, size = 0x4, offset = 0x4, fixed_abs, tag = 'smem constant byte address 0x4 - core index']
  #allocation1 [shape = 'u32[72,128]{1,0:T(1,128)}', space=vmem, size = 0x9000, scoped, tag = 'internal scratch']
  #allocation2 [shape = 'f32[8,128]{1,0:T(8,128)}', space=vmem, size = 0x1000, scoped, tag = 'scratch operand']
  #allocation3 [shape = 's32[8]{0}', space=sflag, size = 0x20, scoped, tag = 'scratch operand']
  #allocation4 [shape = 's32[1]{0}', space=sflag, size = 0x4, scoped, tag = 'scoped memory for tpu_custom_call.1']
  #allocation5 [shape = 'u8[512]{0}', space=smem, size = 0x200, scoped, tag = 'prefetched SMEM operand 0']
  #allocation6 [shape = 's32[1]{0:T(128)S(6)}', space=smem, size = 0x200, scoped, tag = 'prefetched SMEM operand 1']
  #allocation9 [shape = 's32[]', space=sflag, size = 0x4, offset = 0, fixed_abs, tag = 'sflag constant byte address 0x0 - dummy sync flag']
  #allocation10 [shape = 's32[]', space=sflag, size = 0x4, offset = 0, fixed_abs, tag = 'sflag constant byte address 0x0 - dummy sync flag']
  #allocation11 [shape = 'u32[]', space=smem, size = 0x4, offset = 0x44, fixed_abs, tag = 'smem constant byte address 0x44 - assertion arg 0']
  #allocation12 [shape = 'u32[]', space=smem, size = 0x4, offset = 0x48, fixed_abs, tag = 'smem constant byte address 0x48 - assertion arg 1']
  #allocation13 [shape = 's32[]', space=sflag, size = 0x4, offset = 0, fixed_abs, tag = 'sflag constant byte address 0x0 - dummy sync flag']
  #allocation14 [shape = 's32[]', space=sflag, size = 0x4, offset = 0, fixed_abs, tag = 'sflag constant byte address 0x0 - dummy sync flag']
  #allocation15 [shape = 's32[]', space=sflag, size = 0x4, offset = 0, fixed_abs, tag = 'sflag constant byte address 0x0 - dummy sync flag']
  #allocation16 [shape = 's32[]', space=sflag, size = 0x4, offset = 0, fixed_abs, tag = 'sflag constant byte address 0x0 - dummy sync flag']
  #allocation17 [shape = 's32[]', space=sflag, size = 0x4, offset = 0, fixed_abs, tag = 'sflag constant byte address 0x0 - dummy sync flag']
  #allocation18 [shape = 's32[]', space=sflag, size = 0x4, offset = 0, fixed_abs, tag = 'sflag constant byte address 0x0 - dummy sync flag']
  #allocation19 [shape = 's32[]', space=sflag, size = 0x4, offset = 0, fixed_abs, tag = 'sflag constant byte address 0x0 - dummy sync flag']
  #allocation20 [shape = 's32[]', space=sflag, size = 0x4, offset = 0, fixed_abs, tag = 'sflag constant byte address 0x0 - dummy sync flag']
  #allocation21 [shape = 's32[]', space=sflag, size = 0x4, offset = 0, fixed_abs, tag = 'sflag constant byte address 0x0 - dummy sync flag']
  #allocation22 [shape = 's32[]', space=sflag, size = 0x4, offset = 0, fixed_abs, tag = 'sflag constant byte address 0x0 - dummy sync flag']
  #allocation23 [shape = 's32[]', space=sflag, size = 0x4, offset = 0, fixed_abs, tag = 'sflag constant byte address 0x0 - dummy sync flag']
  #allocation24 [shape = 's32[]', space=sflag, size = 0x4, offset = 0, fixed_abs, tag = 'sflag constant byte address 0x0 - dummy sync flag']
  #allocation25 [shape = 's32[]', space=sflag, size = 0x4, offset = 0, fixed_abs, tag = 'sflag constant byte address 0x0 - dummy sync flag']
  #allocation26 [shape = 's32[]', space=sflag, size = 0x4, offset = 0, fixed_abs, tag = 'sflag constant byte address 0x0 - dummy sync flag']
  %s0 = inlined_call_operand.vmem [shape: s32[16], index: 0, kind: input, shape index: {}]
  %s1 = inlined_call_operand.<no memory space> [shape: s32[1], index: 1, kind: input, shape index: {}]
  %s2 = inlined_call_operand.vmem [shape: s32[16,1], index: 2, kind: input, shape index: {}]
  %s3 = inlined_call_operand.hbm [shape: f32[64,128], index: 3, kind: input, shape index: {}]
  %s4 = inlined_call_operand.vmem [shape: f32[8,128], index: 4, kind: input, shape index: {}]
  %s5 = inlined_call_operand.vmem [shape: f32[8,128], index: 5, kind: input, shape index: {}]
  %s6 = inlined_call_operand.hbm [shape: f32[16,128], index: 6, kind: output, shape index: {}]
  %s7 = sld [smem:[#allocation0]]
  $region77: #{tpu_custom_call.1} parent=0
    _
  %s9 = ssub.s32 1, %s7
  %s10 = scalar_select 0, %s9, %s7
  %s12 = sshll.u32 %s0, 4
  %s13 = int_to_ptr.vmem [resolvable:$true] %s12
  %15 = dma.vmem_to_smem %s13, 16, [#allocation5], [#allocation4]
  %16 = sst [smem:[#allocation6]] %s1
  %18 = dma.done [#allocation4], 16
  %19 = sfence
  $region1: #{tpu_custom_call.1} parent=0
    #allocation7 [shape = 'u8[8192]{0}', space=vmem, size = 0x2000, scoped, tag = 'output window, operand 0']
    #allocation8 [shape = 's32[2]{0}', space=sflag, size = 0x8, scoped, tag = 'scoped memory for tpu_custom_call.1']
    %20 = vsyncpa [#allocation8], 0
    %s21 = scalar_lea.sflag [#allocation8], 1
    %22 = vsyncpa %s21, 0
    loop: start=0, step=1, limit=4
    $region2: #{tpu_custom_call.1} parent=1 // loop_pre_header
      _
    $region3: #{tpu_custom_call.1} parent=1 // loop_header
      %s24 = sphi 0, %s28
      %p25 = scmp.ge.s32.totalorder %s24, 4
      %s34 = sphi 0, %s36
      %s37 = sphi 0, %s34
      %s38 = sphi 0, %s37
      %s54 = sphi 0, %s38
      %s58 = sphi 0, %s58
      %s60 = sphi 0, %s58
      %s61 = sphi 0, %s60
      %s75 = sphi 0, %s61
      %s79 = sphi 0, %s79
      %s81 = sphi 0, %s79
      %s82 = sphi 0, %s81
      %s96 = sphi 0, %s82
      %s102 = sphi 0, %s104
      %s105 = sphi 0, %s102
      %s106 = sphi 0, %s105
      %s122 = sphi 0, %s106
    $region4: #{tpu_custom_call.1} parent=1 // loop_header_branch
      %27 = sbr.rel (%p25) target = $region8
    $region5: #{tpu_custom_call.1} parent=1 // loop_body
      %s29 = ssub.s32 %s24, 1
      %s30 = ssub.s32 %s24, 2
      %s31 = sadd.s32 %s24, 1
      %s32 = ssub.s32 %s24, %s31
      %p33 = scmp.eq.s32.totalorder %s32, 0
      %s35 = sadd.s32 %s34, 1
      %s36 = scalar_select %p33, %s34, %s35
      %p39 = pneg %p33
      %p40 = scmp.eq.s32.totalorder %s24, 1
      %p41 = por %p39, %p40
      %p42 = scmp.ne.s32.totalorder %s34, %s37
      %p43 = scmp.eq.s32.totalorder %s24, 0
      %p44 = por %p42, %p43
      %p45 = scmp.ne.s32.totalorder %s34, %s37
      %p46 = scmp.eq.s32.totalorder %s29, 1
      %p47 = por %p45, %p46
      %p48 = scmp.ne.s32.totalorder %s37, %s38
      %p49 = scmp.eq.s32.totalorder %s29, 0
      %p50 = por %p48, %p49
      %p51 = scmp.ne.s32.totalorder %s37, %s38
      %p52 = scmp.eq.s32.totalorder %s30, 1
      %p53 = por %p51, %p52
      %p55 = scmp.ne.s32.totalorder %s38, %s54
      %p56 = scmp.eq.s32.totalorder %s30, 0
      %p57 = por %p55, %p56
      %s59 = sadd.s32 %s58, 1
      %p62 = scmp.eq.s32.totalorder %s24, 1
      %p63 = scmp.ne.s32.totalorder %s58, %s60
      %p64 = scmp.eq.s32.totalorder %s24, 0
      %p65 = por %p63, %p64
      %p66 = scmp.ne.s32.totalorder %s58, %s60
      %p67 = scmp.eq.s32.totalorder %s29, 1
      %p68 = por %p66, %p67
      %p69 = scmp.ne.s32.totalorder %s60, %s61
      %p70 = scmp.eq.s32.totalorder %s29, 0
      %p71 = por %p69, %p70
      %p72 = scmp.ne.s32.totalorder %s60, %s61
      %p73 = scmp.eq.s32.totalorder %s30, 1
      %p74 = por %p72, %p73
      %p76 = scmp.ne.s32.totalorder %s61, %s75
      %p77 = scmp.eq.s32.totalorder %s30, 0
      %p78 = por %p76, %p77
      %s80 = sadd.s32 %s79, 1
      %p83 = scmp.eq.s32.totalorder %s24, 1
      %p84 = scmp.ne.s32.totalorder %s79, %s81
      %p85 = scmp.eq.s32.totalorder %s24, 0
      %p86 = por %p84, %p85
      %p87 = scmp.ne.s32.totalorder %s79, %s81
      %p88 = scmp.eq.s32.totalorder %s29, 1
      %p89 = por %p87, %p88
      %p90 = scmp.ne.s32.totalorder %s81, %s82
      %p91 = scmp.eq.s32.totalorder %s29, 0
      %p92 = por %p90, %p91
      %p93 = scmp.ne.s32.totalorder %s81, %s82
      %p94 = scmp.eq.s32.totalorder %s30, 1
      %p95 = por %p93, %p94
      %p97 = scmp.ne.s32.totalorder %s82, %s96
      %p98 = scmp.eq.s32.totalorder %s30, 0
      %p99 = por %p97, %p98
      %s100 = ssub.s32 %s24, %s31
      %p101 = scmp.eq.s32.totalorder %s100, 0
      %s103 = sadd.s32 %s102, 1
      %s104 = scalar_select %p101, %s102, %s103
      %p107 = pneg %p101
      %p108 = scmp.eq.s32.totalorder %s24, 1
      %p109 = por %p107, %p108
      %p110 = scmp.ne.s32.totalorder %s102, %s105
      %p111 = scmp.eq.s32.totalorder %s24, 0
      %p112 = por %p110, %p111
      %p113 = scmp.ne.s32.totalorder %s102, %s105
      %p114 = scmp.eq.s32.totalorder %s29, 1
      %p115 = por %p113, %p114
      %p116 = scmp.ne.s32.totalorder %s105, %s106
      %p117 = scmp.eq.s32.totalorder %s29, 0
      %p118 = por %p116, %p117
      %p119 = scmp.ne.s32.totalorder %s105, %s106
      %p120 = scmp.eq.s32.totalorder %s30, 1
      %p121 = por %p119, %p120
      %p123 = scmp.ne.s32.totalorder %s106, %s122
      %p124 = scmp.eq.s32.totalorder %s30, 0
      %p125 = por %p123, %p124
      %p126 = scmp.le.s32.totalorder 1, %s24
      %p127 = scmp.lt.s32.totalorder %s24, 3
      %p128 = pnand %p126, %p127
      %p129 = pneg %p128
      // Predicated region
      $region9: #{tpu_custom_call.1} parent=5 // pred_check
        _
      $region10: #{tpu_custom_call.1} parent=5 // pred_check_branch
        %131 = sbr.rel (%p128) target = $region12
      $region11: #{tpu_custom_call.1} parent=5 // pred_region
        %s132 = ssub.s32 %s24, 1
        // Predicated region
        $region13: #{tpu_custom_call.1} parent=11 // pred_check
          %p133 = pneg %p71
        $region14: #{tpu_custom_call.1} parent=11 // pred_check_branch
          %135 = sbr.rel (%p133) target = $region16
        $region15: #{tpu_custom_call.1} parent=11 // pred_region
          _
        $region16: #{tpu_custom_call.1} parent=11 // pred_fallthru
          _
        // Predicated region
        $region17: #{tpu_custom_call.1} parent=11 // pred_check
          %p136 = pneg %p92
        $region18: #{tpu_custom_call.1} parent=11 // pred_check_branch
          %138 = sbr.rel (%p136) target = $region20
        $region19: #{tpu_custom_call.1} parent=11 // pred_region
          _
        $region20: #{tpu_custom_call.1} parent=11 // pred_fallthru
          _
      $region12: #{tpu_custom_call.1} parent=5 // pred_fallthru
        _
      %p139 = scmp.lt.s32.totalorder %s24, 2
      // Predicated region
      $region21: #{tpu_custom_call.1} parent=5 // pred_check
        %p140 = pneg %p139
      $region22: #{tpu_custom_call.1} parent=5 // pred_check_branch
        %142 = sbr.rel (%p140) target = $region24
      $region23: #{tpu_custom_call.1} parent=5 // pred_region
        // Predicated region
        $region25: #{tpu_custom_call.1} parent=23 // pred_check
          %p143 = pneg %p44
        $region26: #{tpu_custom_call.1} parent=23 // pred_check_branch
          %145 = sbr.rel (%p143) target = $region28
        $region27: #{tpu_custom_call.1} parent=23 // pred_region
          %p146 = scmp.lt.s32.totalorder %s24, 1
          %s147 = scalar_select %p146, %s24, 1
          %s148 = smul.addr %s147, 8
          %s149 = scalar_lea.vmem %s2, %s148
        $region28: #{tpu_custom_call.1} parent=23 // pred_fallthru
          _
      $region24: #{tpu_custom_call.1} parent=5 // pred_fallthru
        _
      %p150 = scmp.le.s32.totalorder 1, %s24
      %p151 = scmp.lt.s32.totalorder %s24, 3
      %p152 = pnand %p150, %p151
      %p153 = pneg %p152
      // Predicated region
      $region29: #{tpu_custom_call.1} parent=5 // pred_check
        _
      $region30: #{tpu_custom_call.1} parent=5 // pred_check_branch
        %155 = sbr.rel (%p152) target = $region32
      $region31: #{tpu_custom_call.1} parent=5 // pred_region
        %s156 = ssub.s32 %s24, 1
        %p157 = scmp.lt.s32.totalorder %s29, 1
        %s158 = scalar_select %p157, %s29, 1
        %s159 = smul.addr %s158, 8
        %s160 = scalar_lea.vmem %s2, %s159
        %p161 = pneg %p50
        %p162 = pneg %p47
        %p163 = pneg %p71
        %p164 = pneg %p68
        %p165 = pneg %p92
        %p166 = pneg %p89
        %p167 = pneg %p118
        %p168 = pneg %p115
        %s169 = sand.u32 %s105, 1
        %s170 = scalar_lea.sflag [#allocation8], %s169
        %s171 = sand.u32 %s105, 1
        %s172 = smul.addr %s171, 8
        %s173 = scalar_lea.vmem [#allocation7], %s172
        %p174 = scmp.lt.s32.totalorder %s29, 1
        %s175 = scalar_select %p174, %s29, 1
        %s176 = smul.addr %s175, 8
        %s177 = scalar_lea.vmem %s2, %s176
        %s178 = smul.u32 %s29, 8
        %s179 = sld [smem:[#allocation5 + %s178]]
        %s180 = scalar_lea.hbm %s3, %s179
        // Predicated region
        $region33: #{tpu_custom_call.1} parent=31 // pred_check
          _
        $region34: #{tpu_custom_call.1} parent=31 // pred_check_branch
          %182 = sbr.rel target = $region36
        $region35: #{tpu_custom_call.1} parent=31 // pred_region
          %183 = sst [smem:[#allocation11]] [#allocation10]
          %184 = sst [smem:[#allocation12]] [#allocation9]
        $region36: #{tpu_custom_call.1} parent=31 // pred_fallthru
          _
        %186 = shalt.err (0)
        %s188 = sshll.u32 %s180, 4
        %s189 = int_to_ptr.hbm [resolvable:$true] %s188
        %s190 = sshll.u32 [#allocation2], 4
        %s191 = int_to_ptr.vmem [resolvable:$true] %s190
        %193 = dma.hbm_to_vmem [thread:$0]  %s189, 16, %s191, [#allocation3]
        %s194 = sadd.s32 %s178, 1
        %s195 = sld [smem:[#allocation5 + %s194]]
        %s196 = scalar_lea.hbm %s3, %s195
        %s197 = scalar_lea.vmem [#allocation2], 1
        %s198 = scalar_lea.sflag [#allocation3], 1
        // Predicated region
        $region37: #{tpu_custom_call.1} parent=31 // pred_check
          _
        $region38: #{tpu_custom_call.1} parent=31 // pred_check_branch
          %200 = sbr.rel target = $region40
        $region39: #{tpu_custom_call.1} parent=31 // pred_region
          %201 = sst [smem:[#allocation11]] [#allocation14]
          %202 = sst [smem:[#allocation12]] [#allocation13]
        $region40: #{tpu_custom_call.1} parent=31 // pred_fallthru
          _
        %204 = shalt.err (0)
        %s206 = sshll.u32 %s196, 4
        %s207 = int_to_ptr.hbm [resolvable:$true] %s206
        %s208 = sshll.u32 %s197, 4
        %s209 = int_to_ptr.vmem [resolvable:$true] %s208
        %211 = dma.hbm_to_vmem [thread:$0]  %s207, 16, %s209, %s198
        %s212 = sadd.s32 %s178, 2
        %s213 = sld [smem:[#allocation5 + %s212]]
        %s214 = scalar_lea.hbm %s3, %s213
        %s215 = scalar_lea.vmem [#allocation2], 2
        %s216 = scalar_lea.sflag [#allocation3], 2
        // Predicated region
        $region41: #{tpu_custom_call.1} parent=31 // pred_check
          _
        $region42: #{tpu_custom_call.1} parent=31 // pred_check_branch
          %218 = sbr.rel target = $region44
        $region43: #{tpu_custom_call.1} parent=31 // pred_region
          %219 = sst [smem:[#allocation11]] [#allocation16]
          %220 = sst [smem:[#allocation12]] [#allocation15]
        $region44: #{tpu_custom_call.1} parent=31 // pred_fallthru
          _
        %222 = shalt.err (0)
        %s224 = sshll.u32 %s214, 4
        %s225 = int_to_ptr.hbm [resolvable:$true] %s224
        %s226 = sshll.u32 %s215, 4
        %s227 = int_to_ptr.vmem [resolvable:$true] %s226
        %229 = dma.hbm_to_vmem [thread:$0]  %s225, 16, %s227, %s216
        %s230 = sadd.s32 %s178, 3
        %s231 = sld [smem:[#allocation5 + %s230]]
        %s232 = scalar_lea.hbm %s3, %s231
        %s233 = scalar_lea.vmem [#allocation2], 3
        %s234 = scalar_lea.sflag [#allocation3], 3
        // Predicated region
        $region45: #{tpu_custom_call.1} parent=31 // pred_check
          _
        $region46: #{tpu_custom_call.1} parent=31 // pred_check_branch
          %236 = sbr.rel target = $region48
        $region47: #{tpu_custom_call.1} parent=31 // pred_region
          %237 = sst [smem:[#allocation11]] [#allocation18]
          %238 = sst [smem:[#allocation12]] [#allocation17]
        $region48: #{tpu_custom_call.1} parent=31 // pred_fallthru
          _
        %240 = shalt.err (0)
        %s242 = sshll.u32 %s232, 4
        %s243 = int_to_ptr.hbm [resolvable:$true] %s242
        %s244 = sshll.u32 %s233, 4
        %s245 = int_to_ptr.vmem [resolvable:$true] %s244
        %247 = dma.hbm_to_vmem [thread:$0]  %s243, 16, %s245, %s234
        %s248 = sadd.s32 %s178, 4
        %s249 = sld [smem:[#allocation5 + %s248]]
        %s250 = scalar_lea.hbm %s3, %s249
        %s251 = scalar_lea.vmem [#allocation2], 4
        %s252 = scalar_lea.sflag [#allocation3], 4
        // Predicated region
        $region49: #{tpu_custom_call.1} parent=31 // pred_check
          _
        $region50: #{tpu_custom_call.1} parent=31 // pred_check_branch
          %254 = sbr.rel target = $region52
        $region51: #{tpu_custom_call.1} parent=31 // pred_region
          %255 = sst [smem:[#allocation11]] [#allocation20]
          %256 = sst [smem:[#allocation12]] [#allocation19]
        $region52: #{tpu_custom_call.1} parent=31 // pred_fallthru
          _
        %258 = shalt.err (0)
        %s260 = sshll.u32 %s250, 4
        %s261 = int_to_ptr.hbm [resolvable:$true] %s260
        %s262 = sshll.u32 %s251, 4
        %s263 = int_to_ptr.vmem [resolvable:$true] %s262
        %265 = dma.hbm_to_vmem [thread:$0]  %s261, 16, %s263, %s252
        %s266 = sadd.s32 %s178, 5
        %s267 = sld [smem:[#allocation5 + %s266]]
        %s268 = scalar_lea.hbm %s3, %s267
        %s269 = scalar_lea.vmem [#allocation2], 5
        %s270 = scalar_lea.sflag [#allocation3], 5
        // Predicated region
        $region53: #{tpu_custom_call.1} parent=31 // pred_check
          _
        $region54: #{tpu_custom_call.1} parent=31 // pred_check_branch
          %272 = sbr.rel target = $region56
        $region55: #{tpu_custom_call.1} parent=31 // pred_region
          %273 = sst [smem:[#allocation11]] [#allocation22]
          %274 = sst [smem:[#allocation12]] [#allocation21]
        $region56: #{tpu_custom_call.1} parent=31 // pred_fallthru
          _
        %276 = shalt.err (0)
        %s278 = sshll.u32 %s268, 4
        %s279 = int_to_ptr.hbm [resolvable:$true] %s278
        %s280 = sshll.u32 %s269, 4
        %s281 = int_to_ptr.vmem [resolvable:$true] %s280
        %283 = dma.hbm_to_vmem [thread:$0]  %s279, 16, %s281, %s270
        %s284 = sadd.s32 %s178, 6
        %s285 = sld [smem:[#allocation5 + %s284]]
        %s286 = scalar_lea.hbm %s3, %s285
        %s287 = scalar_lea.vmem [#allocation2], 6
        %s288 = scalar_lea.sflag [#allocation3], 6
        // Predicated region
        $region57: #{tpu_custom_call.1} parent=31 // pred_check
          _
        $region58: #{tpu_custom_call.1} parent=31 // pred_check_branch
          %290 = sbr.rel target = $region60
        $region59: #{tpu_custom_call.1} parent=31 // pred_region
          %291 = sst [smem:[#allocation11]] [#allocation24]
          %292 = sst [smem:[#allocation12]] [#allocation23]
        $region60: #{tpu_custom_call.1} parent=31 // pred_fallthru
          _
        %294 = shalt.err (0)
        %s296 = sshll.u32 %s286, 4
        %s297 = int_to_ptr.hbm [resolvable:$true] %s296
        %s298 = sshll.u32 %s287, 4
        %s299 = int_to_ptr.vmem [resolvable:$true] %s298
        %301 = dma.hbm_to_vmem [thread:$0]  %s297, 16, %s299, %s288
        %s302 = sadd.s32 %s178, 7
        %s303 = sld [smem:[#allocation5 + %s302]]
        %s304 = scalar_lea.hbm %s3, %s303
        %s305 = scalar_lea.vmem [#allocation2], 7
        %s306 = scalar_lea.sflag [#allocation3], 7
        // Predicated region
        $region61: #{tpu_custom_call.1} parent=31 // pred_check
          _
        $region62: #{tpu_custom_call.1} parent=31 // pred_check_branch
          %308 = sbr.rel target = $region64
        $region63: #{tpu_custom_call.1} parent=31 // pred_region
          %309 = sst [smem:[#allocation11]] [#allocation26]
          %310 = sst [smem:[#allocation12]] [#allocation25]
        $region64: #{tpu_custom_call.1} parent=31 // pred_fallthru
          _
        %312 = shalt.err (0)
        %s314 = sshll.u32 %s304, 4
        %s315 = int_to_ptr.hbm [resolvable:$true] %s314
        %s316 = sshll.u32 %s305, 4
        %s317 = int_to_ptr.vmem [resolvable:$true] %s316
        %319 = dma.hbm_to_vmem [thread:$0]  %s315, 16, %s317, %s306
        %v320 = vld [vmem:[%s177] sm:$0xff]
        %v321 = vld [vmem:[%s4] sm:$0xff]
        %vm322 = vcmp.eq.s32.totalorder %v320, 0
        %v323 = vsel %vm322, 1, 0
        %324 = vset.pattern.permute.xlu0 0
        %325 = vperm.xlu0 %324, %v323
        %v326 = vpop.permute.xlu0 %325
        %vm327 = vcmp.eq.s32.totalorder %v326, 1
        %v328 = vperm.slane %v321, 0
        %v329 = vsel %vm327, %v328, 0.0
        %vm330 = vcmp.eq.s32.totalorder %v320, 1
        %v331 = vsel %vm330, 1, 0
        %332 = vset.pattern.permute.xlu0 0
        %333 = vperm.xlu0 %332, %v331
        %v334 = vpop.permute.xlu0 %333
        %vm335 = vcmp.eq.s32.totalorder %v334, 1
        %v336 = vperm.slane %v321, 1
        %v337 = vsel %vm335, %v336, 0.0
        %v338 = vadd.f32 %v329, %v337
        %vm339 = vcmp.eq.s32.totalorder %v320, 2
        %v340 = vsel %vm339, 1, 0
        %341 = vset.pattern.permute.xlu0 0
        %342 = vperm.xlu0 %341, %v340
        %v343 = vpop.permute.xlu0 %342
        %vm344 = vcmp.eq.s32.totalorder %v343, 1
        %v345 = vperm.slane %v321, 2
        %v346 = vsel %vm344, %v345, 0.0
        %v347 = vadd.f32 %v338, %v346
        %v348 = vld [vmem:[%s5] sm:$0xff]
        %v349 = vadd.f32 %v347, %v348
        %s350 = smul.u32 1, 1
        %s351 = sshll.u32 %s350, 4
        %352 = dma.done [#allocation3], %s351
        %s353 = sshll.u32 %s350, 4
        %354 = dma.done %s198, %s353
        %s355 = sshll.u32 %s350, 4
        %356 = dma.done %s216, %s355
        %s357 = sshll.u32 %s350, 4
        %358 = dma.done %s234, %s357
        %s359 = sshll.u32 %s350, 4
        %360 = dma.done %s252, %s359
        %s361 = sshll.u32 %s350, 4
        %362 = dma.done %s270, %s361
        %s363 = sshll.u32 %s350, 4
        %364 = dma.done %s288, %s363
        %s365 = sshll.u32 %s350, 4
        %366 = dma.done %s306, %s365
        %v367 = vld [vmem:[#allocation2] sm:$0xff]
        %v368 = vadd.f32 %v349, %v367
        %369 = vst [vmem:[%s173] sm:$0xff] %v368
        %s370 = sand.u32 %s105, 1
        %s371 = scalar_lea.sflag [#allocation8], %s370
        %s372 = sand.u32 %s105, 1
        %s373 = smul.addr %s372, 8
        %s374 = scalar_lea.vmem [#allocation7], %s373
        // Predicated region
        $region65: #{tpu_custom_call.1} parent=31 // pred_check
          %p375 = pneg %p115
        $region66: #{tpu_custom_call.1} parent=31 // pred_check_branch
          %377 = sbr.rel (%p375) target = $region68
        $region67: #{tpu_custom_call.1} parent=31 // pred_region
          %379 = vsyncadd %s371, 0
          %s380 = smul.addr %s29, 8
          %s381 = scalar_lea.hbm %s6, %s380
          %s383 = sshll.u32 %s374, 4
          %s384 = int_to_ptr.vmem [resolvable:$true] %s383
          %s385 = sshll.u32 %s381, 4
          %s386 = int_to_ptr.hbm [resolvable:$true] %s385
          %388 = dma.vmem_to_hbm [thread:$0]  %s384, 128, %s386, %s371
        $region68: #{tpu_custom_call.1} parent=31 // pred_fallthru
          _
      $region32: #{tpu_custom_call.1} parent=5 // pred_fallthru
        _
      %p389 = scmp.le.s32.totalorder 2, %s24
      // Predicated region
      $region69: #{tpu_custom_call.1} parent=5 // pred_check
        %p390 = pneg %p389
      $region70: #{tpu_custom_call.1} parent=5 // pred_check_branch
        %392 = sbr.rel (%p390) target = $region72
      $region71: #{tpu_custom_call.1} parent=5 // pred_region
        %s393 = ssub.s32 %s24, 2
        // Predicated region
        $region73: #{tpu_custom_call.1} parent=71 // pred_check
          %p394 = pneg %p121
        $region74: #{tpu_custom_call.1} parent=71 // pred_check_branch
          %396 = sbr.rel (%p394) target = $region76
        $region75: #{tpu_custom_call.1} parent=71 // pred_region
          %s397 = sand.u32 %s106, 1
          %s398 = scalar_lea.sflag [#allocation8], %s397
          %s399 = sand.u32 %s106, 1
          %s400 = smul.addr %s399, 8
          %s401 = scalar_lea.vmem [#allocation7], %s400
          %403 = dma.done %s398, 128
        $region76: #{tpu_custom_call.1} parent=71 // pred_fallthru
          _
      $region72: #{tpu_custom_call.1} parent=5 // pred_fallthru
        _
    $region6: #{tpu_custom_call.1} parent=1 // loop_footer
      %s28 = sadd.s32 1, %s24
    $region7: #{tpu_custom_call.1} parent=1 // loop_footer_branch
      %23 = sbr.rel target = $region3
    $region8: #{tpu_custom_call.1} parent=1 // loop_exit
      _
    %404 = vsyncpa [#allocation8], 1
    %s405 = scalar_lea.sflag [#allocation8], 1
    %406 = vsyncpa %s405, 1
  %407 = vsyncmov [#allocation3]
  %s408 = vpop.sfrf %407
  %p409 = scmp.eq.s32.totalorder %s408, 0
  %p410 = pneg %p409
  %412 = shalt.err (%p410)
  %s413 = scalar_lea.sflag [#allocation3], 1
  %414 = vsyncmov %s413
  %s415 = vpop.sfrf %414
  %p416 = scmp.eq.s32.totalorder %s415, 0
  %p417 = pneg %p416
  %419 = shalt.err (%p417)
  %s420 = scalar_lea.sflag [#allocation3], 2
  %421 = vsyncmov %s420
  %s422 = vpop.sfrf %421
  %p423 = scmp.eq.s32.totalorder %s422, 0
  %p424 = pneg %p423
  %426 = shalt.err (%p424)
  %s427 = scalar_lea.sflag [#allocation3], 3
  %428 = vsyncmov %s427
  %s429 = vpop.sfrf %428
  %p430 = scmp.eq.s32.totalorder %s429, 0
  %p431 = pneg %p430
  %433 = shalt.err (%p431)
  %s434 = scalar_lea.sflag [#allocation3], 4
  %435 = vsyncmov %s434
  %s436 = vpop.sfrf %435
  %p437 = scmp.eq.s32.totalorder %s436, 0
  %p438 = pneg %p437
  %440 = shalt.err (%p438)
  %s441 = scalar_lea.sflag [#allocation3], 5
  %442 = vsyncmov %s441
  %s443 = vpop.sfrf %442
  %p444 = scmp.eq.s32.totalorder %s443, 0
  %p445 = pneg %p444
  %447 = shalt.err (%p445)
  %s448 = scalar_lea.sflag [#allocation3], 6
  %449 = vsyncmov %s448
  %s450 = vpop.sfrf %449
  %p451 = scmp.eq.s32.totalorder %s450, 0
  %p452 = pneg %p451
  %454 = shalt.err (%p452)
  %s455 = scalar_lea.sflag [#allocation3], 7
  %456 = vsyncmov %s455
  %s457 = vpop.sfrf %456
  %p458 = scmp.eq.s32.totalorder %s457, 0
  %p459 = pneg %p458
  %461 = shalt.err (%p459)

</llo_original>
